<compile_context>
chip_gen: v5e
topology: v5e:2x2
jax: 0.10.0
libtpu: 0.0.40
codegen_flags: <defaults>
</compile_context>

<pallas_src>
import numpy as np
import jax
import jax.numpy as jnp
from jax import lax
from jax.experimental import pallas as pl
from jax.experimental.pallas import tpu as pltpu


def _round_up(x, m):
    return ((x + m - 1) // m) * m


def conv_block(x_nchw, weight, bias, *, kernel=3, pad=1, pixel_norm=True,
               compute_dtype=jnp.bfloat16, fold_taps=None):
    """Forward pass of ConvBlock (stride 1).

    x_nchw : (B, Cin, H, W) float32
    weight : (Cout, Cin, K, K) float32 raw weight_orig; the EqualLR scale
             sqrt(2 / fan_in) is applied here (matching the forward pre-hook).
    bias   : (Cout,) float32
    returns: (B, Cout, Ho, Wo) float32 with Ho = H + 2*pad - K + 1.
    """
    B, Cin, H, W = x_nchw.shape
    Cout = weight.shape[0]
    K = kernel

    Ho = H + 2 * pad - K + 1
    Wo = W + 2 * pad - K + 1
    Hp = H + 2 * pad
    Wp = W + 2 * pad

    # EqualLR: fan_in = weight.size(1) * weight[0][0].numel() = Cin * K * K
    fan_in = Cin * K * K
    w_scaled = weight.astype(jnp.float32) * np.sqrt(2.0 / fan_in)

    if fold_taps is None:
        fold_taps = Cin < 128          # fold taps into the contraction for small Cin

    c_out_p = _round_up(Cout, 128)     # lane-dense output channels
    b_mat = jnp.pad(bias.astype(jnp.float32).reshape(1, Cout),
                    ((0, 0), (0, c_out_p - Cout)))
    inv_cout = 1.0 / Cout              # PixelNorm mean over the TRUE channel count
    out_dtype = compute_dtype
    itemsize = jnp.dtype(compute_dtype).itemsize
    out_itemsize = jnp.dtype(out_dtype).itemsize
    sub_pack = max(8, 32 // itemsize)  # sublane pack: 8 for f32, 16 for bf16

    x_nhwc = jnp.transpose(x_nchw, (0, 2, 3, 1))

    if fold_taps:
        # -------- folded-tap path: one dot of depth K*K*Cin per row tile --------
        KKC = K * K * Cin
        Mp = Ho * Wp                              # Ho full padded-width rows
        tile_m = min(256, _round_up(Mp, 8))
        mp_pad = _round_up(Mp, tile_m)
        n_rt = mp_pad // tile_m

        xp = jnp.pad(x_nhwc, ((0, 0), (pad, pad), (pad, pad), (0, 0)))
        x_flat = xp.reshape(B, Hp * Wp, Cin)
        x_flat = jnp.pad(x_flat, ((0, 0), (0, K - 1), (0, 0)))   # max shift stays in bounds
        # Pack the K*K statically shifted slabs along channels (kh-major, kw, cin).
        slabs = [x_flat[:, kh * Wp + kw: kh * Wp + kw + Mp, :]
                 for kh in range(K) for kw in range(K)]
        packed = jnp.concatenate(slabs, axis=-1)                  # (B, Mp, KKC)
        packed = jnp.pad(packed, ((0, 0), (0, mp_pad - Mp), (0, 0))).astype(compute_dtype)

        # Weight: (Cout, Cin, K, K) -> (K, K, Cin, Cout) -> (K*K*Cin, c_out_p)
        w_mat = jnp.transpose(w_scaled, (2, 3, 1, 0)).reshape(KKC, Cout)
        w_mat = jnp.pad(w_mat, ((0, 0), (0, c_out_p - Cout))).astype(compute_dtype)

        def kernel_fold(x_ref, w_ref, b_ref, o_ref):
            # x_ref: (tile_m, KKC), w_ref: (KKC, c_out_p), b_ref: (1, c_out_p) f32
            acc = jnp.dot(x_ref[...], w_ref[...],
                          preferred_element_type=jnp.float32)     # single MXU pass
            y = acc + b_ref[...]
            if pixel_norm:
                ss = jnp.sum(y * y, axis=-1, keepdims=True)       # XLU lane reduce
                y = y * lax.rsqrt(ss * inv_cout + 1e-8)           # EUP rsqrt
            y = jnp.where(y >= 0.0, y, 0.2 * y)                   # LeakyReLU(0.2)
            o_ref[...] = y.astype(o_ref.dtype)

        flops = 2 * B * mp_pad * KKC * c_out_p + 6 * B * mp_pad * c_out_p
        transc = B * mp_pad if pixel_norm else 0
        bytes_acc = (packed.size * itemsize + w_mat.size * itemsize
                     + b_mat.size * 4 + B * mp_pad * c_out_p * out_itemsize)

        blk_bytes = (2 * tile_m * max(KKC, 128) * itemsize
                     + 2 * KKC * c_out_p * itemsize
                     + 2 * tile_m * c_out_p * out_itemsize
                     + 2 * tile_m * c_out_p * 4)
        vmem_limit = int(min(64 * 2**20, max(32 * 2**20, 2 * blk_bytes)))

        out = pl.pallas_call(
            kernel_fold,
            out_shape=jax.ShapeDtypeStruct((B, mp_pad, c_out_p), out_dtype),
            grid=(B, n_rt),
            in_specs=[
                pl.BlockSpec((None, tile_m, KKC), lambda b, t: (b, t, 0)),   # packed LHS row tile
                pl.BlockSpec((KKC, c_out_p), lambda b, t: (0, 0)),           # resident weight
                pl.BlockSpec((1, c_out_p), lambda b, t: (0, 0)),             # resident bias
            ],
            out_specs=pl.BlockSpec((None, tile_m, c_out_p), lambda b, t: (b, t, 0)),
            compiler_params=pltpu.CompilerParams(
                dimension_semantics=("parallel", "parallel"),
                vmem_limit_bytes=vmem_limit,
            ),
            cost_estimate=pl.CostEstimate(flops=int(flops),
                                          transcendentals=int(transc),
                                          bytes_accessed=int(bytes_acc)),
        )(packed, w_mat, b_mat)

        out = out[:, :Mp].reshape(B, Ho, Wp, c_out_p)[:, :, :Wo, :Cout]

    else:
        # -------- shifted-slab taps path (large Cin): K*K dots, VMEM f32 accumulation --------
        Wp_k = _round_up(Wp, sub_pack)            # sublane-align the kh*Wp shift offsets
        Mp = Ho * Wp_k
        xp = jnp.pad(x_nhwc, ((0, 0), (pad, pad), (pad, pad + Wp_k - Wp), (0, 0)))
        n_flat = Hp * Wp_k
        n_flat_pad = _round_up(n_flat + (K - 1), sub_pack)
        x_flat = xp.reshape(B, n_flat, Cin)
        x_flat = jnp.pad(x_flat, ((0, 0), (0, n_flat_pad - n_flat), (0, 0))).astype(compute_dtype)

        # Weight: (Cout, Cin, K, K) -> (K*K, Cin, c_out_p)
        w_mat = jnp.transpose(w_scaled, (2, 3, 1, 0)).reshape(K * K, Cin, Cout)
        w_mat = jnp.pad(w_mat, ((0, 0), (0, 0), (0, c_out_p - Cout))).astype(compute_dtype)

        def kernel_taps(x_ref, w_ref, b_ref, o_ref, acc_ref):
            # x_ref: (n_flat_pad, Cin), w_ref: (K*K, Cin, c_out_p),
            # acc_ref: (Mp, c_out_p) f32 VMEM scratch accumulator.
            for idx in range(K * K):
                kh, kw = divmod(idx, K)
                off = kh * Wp_k + kw                        # static, kh shifts sublane-aligned
                xm = x_ref[pl.ds(off, Mp), :]               # (Mp, Cin)
                d = jnp.dot(xm, w_ref[idx], preferred_element_type=jnp.float32)
                if idx == 0:
                    acc_ref[...] = d
                else:
                    acc_ref[...] += d
            y = acc_ref[...] + b_ref[...]
            if pixel_norm:
                ss = jnp.sum(y * y, axis=-1, keepdims=True)
                y = y * lax.rsqrt(ss * inv_cout + 1e-8)
            y = jnp.where(y >= 0.0, y, 0.2 * y)
            o_ref[...] = y.astype(o_ref.dtype)

        flops = 2 * B * Mp * Cin * K * K * c_out_p + 6 * B * Mp * c_out_p
        transc = B * Mp if pixel_norm else 0
        bytes_acc = (x_flat.size * itemsize + w_mat.size * itemsize
                     + b_mat.size * 4 + B * Mp * c_out_p * out_itemsize)

        blk_bytes = (2 * n_flat_pad * max(Cin, 128) * itemsize
                     + 2 * K * K * _round_up(Cin, sub_pack) * c_out_p * itemsize
                     + 2 * Mp * c_out_p * out_itemsize
                     + 3 * Mp * c_out_p * 4)
        vmem_limit = int(min(64 * 2**20, max(32 * 2**20, 2 * blk_bytes)))

        out = pl.pallas_call(
            kernel_taps,
            out_shape=jax.ShapeDtypeStruct((B, Mp, c_out_p), out_dtype),
            grid=(B,),
            in_specs=[
                pl.BlockSpec((None, n_flat_pad, Cin), lambda b: (b, 0, 0)),   # per-batch slab
                pl.BlockSpec((K * K, Cin, c_out_p), lambda b: (0, 0, 0)),     # resident weight
                pl.BlockSpec((1, c_out_p), lambda b: (0, 0)),                 # resident bias
            ],
            out_specs=pl.BlockSpec((None, Mp, c_out_p), lambda b: (b, 0, 0)),
            scratch_shapes=[pltpu.VMEM((Mp, c_out_p), jnp.float32)],
            compiler_params=pltpu.CompilerParams(
                dimension_semantics=("parallel",),
                vmem_limit_bytes=vmem_limit,
            ),
            cost_estimate=pl.CostEstimate(flops=int(flops),
                                          transcendentals=int(transc),
                                          bytes_accessed=int(bytes_acc)),
        )(x_flat, w_mat, b_mat)

        out = out.reshape(B, Ho, Wp_k, c_out_p)[:, :, :Wo, :Cout]

    # NHWC (padded channels / junk cols already sliced) -> NCHW, f32 interface
    return jnp.transpose(out, (0, 3, 1, 2)).astype(jnp.float32)


def _reference(x_nchw, weight, bias, *, kernel=3, pad=1, pixel_norm=True):
    """Pure-JAX reference (mirrors the PyTorch module) for validation."""
    Cin = x_nchw.shape[1]
    fan_in = Cin * kernel * kernel
    w = weight.astype(jnp.float32) * np.sqrt(2.0 / fan_in)
    y = jax.lax.conv_general_dilated(
        x_nchw, w, window_strides=(1, 1),
        padding=((pad, pad), (pad, pad)),
        dimension_numbers=("NCHW", "OIHW", "NCHW"),
    ) + bias.reshape(1, -1, 1, 1)
    if pixel_norm:
        y = y / jnp.sqrt(jnp.mean(y * y, axis=1, keepdims=True) + 1e-8)
    return jnp.where(y >= 0, y, 0.2 * y)


if __name__ == "__main__":
    # Shapes consistent with ConvBlock(in_channel=4, out_channel=8, kernel=3, pad=1)
    B, Cin, H, W = 2, 4, 16, 16
    Cout, K, PAD = 8, 3, 1

    key = jax.random.PRNGKey(0)
    kx, kw = jax.random.split(key)
    x = jax.random.normal(kx, (B, Cin, H, W), dtype=jnp.float32)
    # EqualConv2d init: weight ~ N(0, 1), bias = 0
    weight = jax.random.normal(kw, (Cout, Cin, K, K), dtype=jnp.float32)
    bias = jnp.zeros((Cout,), dtype=jnp.float32)

    ref = _reference(x, weight, bias, kernel=K, pad=PAD, pixel_norm=True)
    ref_nn = _reference(x, weight, bias, kernel=K, pad=PAD, pixel_norm=False)

    # Folded-tap path (auto-selected for Cin=4), bf16 MXU operands.
    out = jax.block_until_ready(conv_block(x, weight, bias, kernel=K, pad=PAD, pixel_norm=True))
    assert out.shape == (B, Cout, H, W), out.shape
    np.testing.assert_allclose(np.asarray(out), np.asarray(ref), rtol=5e-2, atol=5e-2)

    # pixel_norm=False branch (bf16).
    out_nn = jax.block_until_ready(conv_block(x, weight, bias, kernel=K, pad=PAD, pixel_norm=False))
    np.testing.assert_allclose(np.asarray(out_nn), np.asarray(ref_nn), rtol=5e-2, atol=5e-2)

    # Folded path, f32 compute — tight numerical check of the kernel structure.
    out32 = jax.block_until_ready(conv_block(x, weight, bias, kernel=K, pad=PAD, pixel_norm=True,
                                             compute_dtype=jnp.float32))
    np.testing.assert_allclose(np.asarray(out32), np.asarray(ref), rtol=1e-4, atol=1e-4)

    # Large-Cin fallback path (shifted-slab taps + VMEM accumulator), forced at toy shape.
    out_t32 = jax.block_until_ready(conv_block(x, weight, bias, kernel=K, pad=PAD, pixel_norm=True,
                                               compute_dtype=jnp.float32, fold_taps=False))
    np.testing.assert_allclose(np.asarray(out_t32), np.asarray(ref), rtol=1e-4, atol=1e-4)

    out_tbf = jax.block_until_ready(conv_block(x, weight, bias, kernel=K, pad=PAD, pixel_norm=True,
                                               fold_taps=False))
    np.testing.assert_allclose(np.asarray(out_tbf), np.asarray(ref), rtol=5e-2, atol=5e-2)

    print("KERNEL_OK")
</pallas_src>

<mosaic_0001>
module attributes {stable_mosaic.version = 11 : i64} {
  func.func @kernel_fold(%arg0: i32, %arg1: i32, %arg2: memref<1x256x36xbf16, #tpu.memory_space<vmem>>, %arg3: memref<36x128xbf16, #tpu.memory_space<vmem>>, %arg4: memref<1x128xf32, #tpu.memory_space<vmem>>, %arg5: memref<1x256x128xbf16, #tpu.memory_space<vmem>>) attributes {dimension_semantics = [#tpu.dimension_semantics<parallel>, #tpu.dimension_semantics<parallel>], iteration_bounds = array<i64: 2, 2>, scalar_prefetch = 0 : i64, scratch_operands = 0 : i64, tpu.core_type = #tpu.core_type<tc>, window_params = [{transform_indices = @transform_0, window_bounds = array<i64: 1, 256, 36>}, {pipeline_mode = #tpu.pipeline_mode<synchronous>, transform_indices = @transform_1, window_bounds = array<i64: 36, 128>}, {pipeline_mode = #tpu.pipeline_mode<synchronous>, transform_indices = @transform_2, window_bounds = array<i64: 1, 128>}, {transform_indices = @transform_3, window_bounds = array<i64: 1, 256, 128>}]} {
    %c0 = arith.constant 0 : index
    %c0_0 = arith.constant 0 : index
    %c0_1 = arith.constant 0 : index
    %0 = vector.load %arg2[%c0, %c0_0, %c0_1] : memref<1x256x36xbf16, #tpu.memory_space<vmem>>, vector<1x256x36xbf16>
    %1 = vector.shape_cast %0 : vector<1x256x36xbf16> to vector<256x36xbf16>
    %c0_2 = arith.constant 0 : index
    %c0_3 = arith.constant 0 : index
    %2 = vector.load %arg3[%c0_2, %c0_3] : memref<36x128xbf16, #tpu.memory_space<vmem>>, vector<36x128xbf16>
    %cst = arith.constant dense<0.000000e+00> : vector<256x128xf32>
    %3 = tpu.matmul %1, %2, %cst {dimension_numbers = #tpu.dot_dimension_numbers<[1], [0], [0], [1], [0, 0, 1, 1], [], []>} : vector<256x36xbf16>, vector<36x128xbf16>, vector<256x128xf32> -> vector<256x128xf32>
    %c0_4 = arith.constant 0 : index
    %c0_5 = arith.constant 0 : index
    %4 = vector.load %arg4[%c0_4, %c0_5] : memref<1x128xf32, #tpu.memory_space<vmem>>, vector<1x128xf32>
    %5 = vector.broadcast %4 : vector<1x128xf32> to vector<256x128xf32>
    %6 = arith.addf %3, %5 : vector<256x128xf32>
    %7 = arith.mulf %6, %6 : vector<256x128xf32>
    %cst_6 = arith.constant dense<0.000000e+00> : vector<256xf32>
    %8 = vector.multi_reduction <add>, %7, %cst_6 [1] : vector<256x128xf32> to vector<256xf32>
    %9 = vector.shape_cast %8 : vector<256xf32> to vector<256x1xf32>
    %cst_7 = arith.constant 1.250000e-01 : f32
    %10 = vector.broadcast %cst_7 : f32 to vector<256x1xf32>
    %11 = arith.mulf %9, %10 : vector<256x1xf32>
    %cst_8 = arith.constant 9.99999993E-9 : f32
    %12 = vector.broadcast %cst_8 : f32 to vector<256x1xf32>
    %13 = arith.addf %11, %12 : vector<256x1xf32>
    %14 = math.rsqrt %13 : vector<256x1xf32>
    %15 = vector.broadcast %14 : vector<256x1xf32> to vector<256x128xf32>
    %16 = arith.mulf %6, %15 : vector<256x128xf32>
    %cst_9 = arith.constant 0.000000e+00 : f32
    %17 = vector.broadcast %cst_9 : f32 to vector<256x128xf32>
    %18 = arith.cmpf oge, %16, %17 : vector<256x128xf32>
    %cst_10 = arith.constant 2.000000e-01 : f32
    %19 = vector.broadcast %cst_10 : f32 to vector<256x128xf32>
    %20 = arith.mulf %19, %16 : vector<256x128xf32>
    %21 = arith.select %18, %16, %20 : vector<256x128xi1>, vector<256x128xf32>
    %22 = arith.truncf %21 : vector<256x128xf32> to vector<256x128xbf16>
    %c0_11 = arith.constant 0 : index
    %c0_12 = arith.constant 0 : index
    %c0_13 = arith.constant 0 : index
    %23 = vector.load %arg5[%c0_11, %c0_12, %c0_13] : memref<1x256x128xbf16, #tpu.memory_space<vmem>>, vector<1x256x128xbf16>
    %24 = vector.shape_cast %23 : vector<1x256x128xbf16> to vector<256x128xbf16>
    %25 = vector.shape_cast %22 : vector<256x128xbf16> to vector<1x256x128xbf16>
    tpu.vector_store %arg5[%c0_11, %c0_12, %c0_13], %25 {strides = array<i32>} : memref<1x256x128xbf16, #tpu.memory_space<vmem>>, vector<1x256x128xbf16>,
    return
  }
  func.func @transform_0(%arg0: i32, %arg1: i32) -> (i32, i32, i32) {
    %c0_i32 = arith.constant 0 : i32
    %c0_i32_0 = arith.constant 0 : i32
    return %arg0, %arg1, %c0_i32 : i32, i32, i32
  }
  func.func @transform_1(%arg0: i32, %arg1: i32) -> (i32, i32) {
    %c0_i32 = arith.constant 0 : i32
    %c0_i32_0 = arith.constant 0 : i32
    %c0_i32_1 = arith.constant 0 : i32
    return %c0_i32, %c0_i32_0 : i32, i32
  }
  func.func @transform_2(%arg0: i32, %arg1: i32) -> (i32, i32) {
    %c0_i32 = arith.constant 0 : i32
    %c0_i32_0 = arith.constant 0 : i32
    %c0_i32_1 = arith.constant 0 : i32
    return %c0_i32, %c0_i32_0 : i32, i32
  }
  func.func @transform_3(%arg0: i32, %arg1: i32) -> (i32, i32, i32) {
    %c0_i32 = arith.constant 0 : i32
    %c0_i32_0 = arith.constant 0 : i32
    return %arg0, %arg1, %c0_i32 : i32, i32, i32
  }
}

</mosaic_0001>

<llo_original>
// kernel: tpu_custom_call.1
$region0: #{tpu_custom_call.1}
  #allocation0 [shape = 'u32[]', space=smem, size = 0x4, offset = 0x4, fixed_abs, tag = 'smem constant byte address 0x4 - core index']
  #allocation1 [shape = 'u32[72,128]{1,0:T(1,128)}', space=vmem, size = 0x9000, scoped, tag = 'internal scratch']
  %s0 = inlined_call_operand.vmem [shape: bf16[2,512,36], index: 0, kind: input, shape index: {}]
  %s1 = inlined_call_operand.vmem [shape: bf16[36,128], index: 1, kind: input, shape index: {}]
  %s2 = inlined_call_operand.vmem [shape: f32[1,128], index: 2, kind: input, shape index: {}]
  %s3 = inlined_call_operand.hbm [shape: bf16[2,512,128], index: 3, kind: output, shape index: {}]
  %s4 = sld [smem:[#allocation0]]
  $region45: #{tpu_custom_call.1} parent=0
    _
  %s6 = ssub.s32 1, %s4
  %s7 = scalar_select 0, %s6, %s4
  $region1: #{tpu_custom_call.1} parent=0
    #allocation2 [shape = 'u8[131072]{0}', space=vmem, size = 0x20000, scoped, tag = 'output window, operand 0']
    #allocation3 [shape = 's32[2]{0}', space=sflag, size = 0x8, scoped, tag = 'scoped memory for tpu_custom_call.1']
    %8 = vsyncpa [#allocation3], 0
    %s9 = scalar_lea.sflag [#allocation3], 1
    %10 = vsyncpa %s9, 0
    loop: start=0, step=1, limit=6
    $region2: #{tpu_custom_call.1} parent=1 // loop_pre_header
      _
    $region3: #{tpu_custom_call.1} parent=1 // loop_header
      %s12 = sphi 0, %s16
      %p13 = scmp.ge.s32.totalorder %s12, 6
      %s19 = sphi 0, %s31
      %s20 = sphi 0, %s27
      %s21 = sphi 0, %s19
      %s22 = sphi 0, %s20
      %s23 = sphi 0, %s21
      %s24 = sphi 0, %s22
      %s36 = sphi 0, %s38
      %s39 = sphi 0, %s36
      %s40 = sphi 0, %s39
      %s56 = sphi 0, %s40
      %s60 = sphi 0, %s60
      %s62 = sphi 0, %s60
      %s63 = sphi 0, %s62
      %s77 = sphi 0, %s63
      %s81 = sphi 0, %s81
      %s83 = sphi 0, %s81
      %s84 = sphi 0, %s83
      %s98 = sphi 0, %s84
      %s106 = sphi 0, %s108
      %s109 = sphi 0, %s106
      %s110 = sphi 0, %s109
      %s126 = sphi 0, %s110
    $region4: #{tpu_custom_call.1} parent=1 // loop_header_branch
      %15 = sbr.rel (%p13) target = $region8
    $region5: #{tpu_custom_call.1} parent=1 // loop_body
      %s17 = ssub.s32 %s12, 1
      %s18 = ssub.s32 %s12, 2
      %s25 = sadd.s32 1, %s20
      %p26 = scmp.ge.s32.totalorder %s25, 2
      %s27 = scalar_select %p26, 0, %s25
      %s28 = sadd.s32 1, %s19
      %s29 = scalar_select %p26, %s28, %s19
      %p30 = scmp.ge.s32.totalorder %s29, 2
      %s31 = scalar_select %p30, 0, %s29
      %s32 = ssub.s32 %s19, %s31
      %s33 = ssub.s32 %s20, %s27
      %s34 = sor.u32 %s32, %s33
      %p35 = scmp.eq.s32.totalorder %s34, 0
      %s37 = sadd.s32 %s36, 1
      %s38 = scalar_select %p35, %s36, %s37
      %p41 = pneg %p35
      %p42 = scmp.eq.s32.totalorder %s12, 3
      %p43 = por %p41, %p42
      %p44 = scmp.ne.s32.totalorder %s36, %s39
      %p45 = scmp.eq.s32.totalorder %s12, 0
      %p46 = por %p44, %p45
      %p47 = scmp.ne.s32.totalorder %s36, %s39
      %p48 = scmp.eq.s32.totalorder %s17, 3
      %p49 = por %p47, %p48
      %p50 = scmp.ne.s32.totalorder %s39, %s40
      %p51 = scmp.eq.s32.totalorder %s17, 0
      %p52 = por %p50, %p51
      %p53 = scmp.ne.s32.totalorder %s39, %s40
      %p54 = scmp.eq.s32.totalorder %s18, 3
      %p55 = por %p53, %p54
      %p57 = scmp.ne.s32.totalorder %s40, %s56
      %p58 = scmp.eq.s32.totalorder %s18, 0
      %p59 = por %p57, %p58
      %s61 = sadd.s32 %s60, 1
      %p64 = scmp.eq.s32.totalorder %s12, 3
      %p65 = scmp.ne.s32.totalorder %s60, %s62
      %p66 = scmp.eq.s32.totalorder %s12, 0
      %p67 = por %p65, %p66
      %p68 = scmp.ne.s32.totalorder %s60, %s62
      %p69 = scmp.eq.s32.totalorder %s17, 3
      %p70 = por %p68, %p69
      %p71 = scmp.ne.s32.totalorder %s62, %s63
      %p72 = scmp.eq.s32.totalorder %s17, 0
      %p73 = por %p71, %p72
      %p74 = scmp.ne.s32.totalorder %s62, %s63
      %p75 = scmp.eq.s32.totalorder %s18, 3
      %p76 = por %p74, %p75
      %p78 = scmp.ne.s32.totalorder %s63, %s77
      %p79 = scmp.eq.s32.totalorder %s18, 0
      %p80 = por %p78, %p79
      %s82 = sadd.s32 %s81, 1
      %p85 = scmp.eq.s32.totalorder %s12, 3
      %p86 = scmp.ne.s32.totalorder %s81, %s83
      %p87 = scmp.eq.s32.totalorder %s12, 0
      %p88 = por %p86, %p87
      %p89 = scmp.ne.s32.totalorder %s81, %s83
      %p90 = scmp.eq.s32.totalorder %s17, 3
      %p91 = por %p89, %p90
      %p92 = scmp.ne.s32.totalorder %s83, %s84
      %p93 = scmp.eq.s32.totalorder %s17, 0
      %p94 = por %p92, %p93
      %p95 = scmp.ne.s32.totalorder %s83, %s84
      %p96 = scmp.eq.s32.totalorder %s18, 3
      %p97 = por %p95, %p96
      %p99 = scmp.ne.s32.totalorder %s84, %s98
      %p100 = scmp.eq.s32.totalorder %s18, 0
      %p101 = por %p99, %p100
      %s102 = ssub.s32 %s19, %s31
      %s103 = ssub.s32 %s20, %s27
      %s104 = sor.u32 %s102, %s103
      %p105 = scmp.eq.s32.totalorder %s104, 0
      %s107 = sadd.s32 %s106, 1
      %s108 = scalar_select %p105, %s106, %s107
      %p111 = pneg %p105
      %p112 = scmp.eq.s32.totalorder %s12, 3
      %p113 = por %p111, %p112
      %p114 = scmp.ne.s32.totalorder %s106, %s109
      %p115 = scmp.eq.s32.totalorder %s12, 0
      %p116 = por %p114, %p115
      %p117 = scmp.ne.s32.totalorder %s106, %s109
      %p118 = scmp.eq.s32.totalorder %s17, 3
      %p119 = por %p117, %p118
      %p120 = scmp.ne.s32.totalorder %s109, %s110
      %p121 = scmp.eq.s32.totalorder %s17, 0
      %p122 = por %p120, %p121
      %p123 = scmp.ne.s32.totalorder %s109, %s110
      %p124 = scmp.eq.s32.totalorder %s18, 3
      %p125 = por %p123, %p124
      %p127 = scmp.ne.s32.totalorder %s110, %s126
      %p128 = scmp.eq.s32.totalorder %s18, 0
      %p129 = por %p127, %p128
      %p130 = scmp.le.s32.totalorder 1, %s12
      %p131 = scmp.lt.s32.totalorder %s12, 5
      %p132 = pnand %p130, %p131
      %p133 = pneg %p132
      // Predicated region
      $region9: #{tpu_custom_call.1} parent=5 // pred_check
        _
      $region10: #{tpu_custom_call.1} parent=5 // pred_check_branch
        %135 = sbr.rel (%p132) target = $region12
      $region11: #{tpu_custom_call.1} parent=5 // pred_region
        %s136 = ssub.s32 %s12, 1
        // Predicated region
        $region13: #{tpu_custom_call.1} parent=11 // pred_check
          %p137 = pneg %p73
        $region14: #{tpu_custom_call.1} parent=11 // pred_check_branch
          %139 = sbr.rel (%p137) target = $region16
        $region15: #{tpu_custom_call.1} parent=11 // pred_region
          _
        $region16: #{tpu_custom_call.1} parent=11 // pred_fallthru
          _
        // Predicated region
        $region17: #{tpu_custom_call.1} parent=11 // pred_check
          %p140 = pneg %p94
        $region18: #{tpu_custom_call.1} parent=11 // pred_check_branch
          %142 = sbr.rel (%p140) target = $region20
        $region19: #{tpu_custom_call.1} parent=11 // pred_region
          _
        $region20: #{tpu_custom_call.1} parent=11 // pred_fallthru
          _
      $region12: #{tpu_custom_call.1} parent=5 // pred_fallthru
        _
      %p143 = scmp.lt.s32.totalorder %s12, 4
      // Predicated region
      $region21: #{tpu_custom_call.1} parent=5 // pred_check
        %p144 = pneg %p143
      $region22: #{tpu_custom_call.1} parent=5 // pred_check_branch
        %146 = sbr.rel (%p144) target = $region24
      $region23: #{tpu_custom_call.1} parent=5 // pred_region
        // Predicated region
        $region25: #{tpu_custom_call.1} parent=23 // pred_check
          %p147 = pneg %p46
        $region26: #{tpu_custom_call.1} parent=23 // pred_check_branch
          %149 = sbr.rel (%p147) target = $region28
        $region27: #{tpu_custom_call.1} parent=23 // pred_region
          %s150 = smul.u32 32, %s20
          %p151 = scmp.lt.s32.totalorder %s19, 1
          %s152 = scalar_select %p151, %s19, 1
          %p153 = scmp.lt.s32.totalorder %s150, 63
          %s154 = scalar_select %p153, %s150, 63
          %s155 = smul.addr %s152, 64
          %s156 = sadd.s32 %s154, %s155
          %s157 = smul.addr %s156, 4
          %s158 = scalar_lea.vmem %s0, %s157
          %s159 = smul.u32 32, %s20
        $region28: #{tpu_custom_call.1} parent=23 // pred_fallthru
          _
      $region24: #{tpu_custom_call.1} parent=5 // pred_fallthru
        _
      %p160 = scmp.le.s32.totalorder 1, %s12
      %p161 = scmp.lt.s32.totalorder %s12, 5
      %p162 = pnand %p160, %p161
      %p163 = pneg %p162
      // Predicated region
      $region29: #{tpu_custom_call.1} parent=5 // pred_check
        _
      $region30: #{tpu_custom_call.1} parent=5 // pred_check_branch
        %165 = sbr.rel (%p162) target = $region32
      $region31: #{tpu_custom_call.1} parent=5 // pred_region
        %s166 = ssub.s32 %s12, 1
        %s167 = smul.u32 32, %s22
        %p168 = scmp.lt.s32.totalorder %s21, 1
        %s169 = scalar_select %p168, %s21, 1
        %p170 = scmp.lt.s32.totalorder %s167, 63
        %s171 = scalar_select %p170, %s167, 63
        %s172 = smul.addr %s169, 64
        %s173 = sadd.s32 %s171, %s172
        %s174 = smul.addr %s173, 4
        %s175 = scalar_lea.vmem %s0, %s174
        %p176 = pneg %p52
        %p177 = pneg %p49
        %p178 = pneg %p73
        %p179 = pneg %p70
        %p180 = pneg %p94
        %p181 = pneg %p91
        %p182 = pneg %p122
        %p183 = pneg %p119
        %s184 = sand.u32 %s109, 1
        %s185 = scalar_lea.sflag [#allocation3], %s184
        %s186 = sand.u32 %s109, 1
        %s187 = smul.addr %s186, 128
        %s188 = scalar_lea.vmem [#allocation2], %s187
        %s189 = smul.u32 32, %s22
        %p190 = scmp.lt.s32.totalorder %s21, 1
        %s191 = scalar_select %p190, %s21, 1
        %p192 = scmp.lt.s32.totalorder %s189, 63
        %s193 = scalar_select %p192, %s189, 63
        %s194 = smul.addr %s191, 64
        %s195 = sadd.s32 %s193, %s194
        %s196 = smul.addr %s195, 4
        %s197 = scalar_lea.vmem %s0, %s196
        %s198 = smul.u32 32, %s22
        %s199 = smul.u32 32, %s22
        %v201 = vld [vmem:[%s197] sm:$0xf]
        %v202 = vld [vmem:[%s197 + $0x4] sm:$0xf]
        %v203 = vld [vmem:[%s197 + $0x8] sm:$0xf]
        %v204 = vld [vmem:[%s197 + $0xc] sm:$0xf]
        %v205 = vld [vmem:[%s197 + $0x10] sm:$0xf]
        %v206 = vld [vmem:[%s197 + $0x14] sm:$0xf]
        %v207 = vld [vmem:[%s197 + $0x18] sm:$0xf]
        %v208 = vld [vmem:[%s197 + $0x1c] sm:$0xf]
        %v209 = vld [vmem:[%s197 + $0x20] sm:$0xf]
        %v210 = vld [vmem:[%s197 + $0x24] sm:$0xf]
        %v211 = vld [vmem:[%s197 + $0x28] sm:$0xf]
        %v212 = vld [vmem:[%s197 + $0x2c] sm:$0xf]
        %v213 = vld [vmem:[%s197 + $0x30] sm:$0xf]
        %v214 = vld [vmem:[%s197 + $0x34] sm:$0xf]
        %v215 = vld [vmem:[%s197 + $0x38] sm:$0xf]
        %v216 = vld [vmem:[%s197 + $0x3c] sm:$0xf]
        %v217 = vld [vmem:[%s197 + $0x40] sm:$0xf]
        %v218 = vld [vmem:[%s197 + $0x44] sm:$0xf]
        %v219 = vld [vmem:[%s197 + $0x48] sm:$0xf]
        %v220 = vld [vmem:[%s197 + $0x4c] sm:$0xf]
        %v221 = vld [vmem:[%s197 + $0x50] sm:$0xf]
        %v222 = vld [vmem:[%s197 + $0x54] sm:$0xf]
        %v223 = vld [vmem:[%s197 + $0x58] sm:$0xf]
        %v224 = vld [vmem:[%s197 + $0x5c] sm:$0xf]
        %v225 = vld [vmem:[%s197 + $0x60] sm:$0xf]
        %v226 = vld [vmem:[%s197 + $0x64] sm:$0xf]
        %v227 = vld [vmem:[%s197 + $0x68] sm:$0xf]
        %v228 = vld [vmem:[%s197 + $0x6c] sm:$0xf]
        %v229 = vld [vmem:[%s197 + $0x70] sm:$0xf]
        %v230 = vld [vmem:[%s197 + $0x74] sm:$0xf]
        %v231 = vld [vmem:[%s197 + $0x78] sm:$0xf]
        %v232 = vld [vmem:[%s197 + $0x7c] sm:$0xf]
        %v233 = vld [vmem:[%s1] sm:$0xf]
        %v234 = vld [vmem:[%s1 + $0x4] sm:$0xf]
        %v235 = vld [vmem:[%s1 + $0x8] sm:$0xf]
        %v236 = vld [vmem:[%s1 + $0xc] sm:$0xf]
        %v237 = vld [vmem:[%s1 + $0x10] sm:$0x3]
        %v238 = vld [vmem:[%s2] sm:$0x1]
        %v240 = vperm.slane %v238, 0
        %v274 = vunpack.c.l.b16 %v201
        %v275 = vunpack.c.l.b16 %v202
        %v276 = vunpack.c.l.b16 %v203
        %v277 = vunpack.c.l.b16 %v204
        %v278 = vunpack.c.l.b16 %v205
        %v279 = vunpack.c.l.b16 %v206
        %v280 = vunpack.c.l.b16 %v207
        %v281 = vunpack.c.l.b16 %v208
        %v282 = vunpack.c.l.b16 %v209
        %v283 = vunpack.c.l.b16 %v210
        %v284 = vunpack.c.l.b16 %v211
        %v285 = vunpack.c.l.b16 %v212
        %v286 = vunpack.c.l.b16 %v213
        %v287 = vunpack.c.l.b16 %v214
        %v288 = vunpack.c.l.b16 %v215
        %v289 = vunpack.c.l.b16 %v216
        %v290 = vunpack.c.l.b16 %v217
        %v291 = vunpack.c.l.b16 %v218
        %v292 = vunpack.c.l.b16 %v219
        %v293 = vunpack.c.l.b16 %v220
        %v294 = vunpack.c.l.b16 %v221
        %v295 = vunpack.c.l.b16 %v222
        %v296 = vunpack.c.l.b16 %v223
        %v297 = vunpack.c.l.b16 %v224
        %v298 = vunpack.c.l.b16 %v225
        %v299 = vunpack.c.l.b16 %v226
        %v300 = vunpack.c.l.b16 %v227
        %v301 = vunpack.c.l.b16 %v228
        %v302 = vunpack.c.l.b16 %v229
        %v303 = vunpack.c.l.b16 %v230
        %v304 = vunpack.c.l.b16 %v231
        %v305 = vunpack.c.l.b16 %v232
        %v306 = vpack.c.b16 %v275, %v274
        %v307 = vpack.c.b16 %v277, %v276
        %v308 = vpack.c.b16 %v279, %v278
        %v309 = vpack.c.b16 %v281, %v280
        %v310 = vpack.c.b16 %v283, %v282
        %v311 = vpack.c.b16 %v285, %v284
        %v312 = vpack.c.b16 %v287, %v286
        %v313 = vpack.c.b16 %v289, %v288
        %v314 = vpack.c.b16 %v291, %v290
        %v315 = vpack.c.b16 %v293, %v292
        %v316 = vpack.c.b16 %v295, %v294
        %v317 = vpack.c.b16 %v297, %v296
        %v318 = vpack.c.b16 %v299, %v298
        %v319 = vpack.c.b16 %v301, %v300
        %v320 = vpack.c.b16 %v303, %v302
        %v321 = vpack.c.b16 %v305, %v304
        %v327 = vunpack.c.l.b16 %v233
        %v328 = vunpack.c.l.b16 %v234
        %v329 = vunpack.c.l.b16 %v235
        %v330 = vunpack.c.l.b16 %v236
        %v331 = vunpack.c.l.b16 %v237
        %v332 = vpack.c.b16 %v328, %v327
        %v333 = vpack.c.b16 %v330, %v329
        %v334 = vpack.c.b16 %v331, %v331
        %vm337 = vcmask 293888
        %v339 = vsel %vm337, %v306, 0
        %v342 = vsel %vm337, %v307, 0
        %v345 = vsel %vm337, %v308, 0
        %v348 = vsel %vm337, %v309, 0
        %v351 = vsel %vm337, %v310, 0
        %v354 = vsel %vm337, %v311, 0
        %v357 = vsel %vm337, %v312, 0
        %v360 = vsel %vm337, %v313, 0
        %v363 = vsel %vm337, %v314, 0
        %v366 = vsel %vm337, %v315, 0
        %v369 = vsel %vm337, %v316, 0
        %v372 = vsel %vm337, %v317, 0
        %v375 = vsel %vm337, %v318, 0
        %v378 = vsel %vm337, %v319, 0
        %v381 = vsel %vm337, %v320, 0
        %v384 = vsel %vm337, %v321, 0
        %vm386 = vcmask 1041408
        %v388 = vsel %vm386, %v334, 0
        %390 = vmatpush.bf16.msra.mxu0 0
        %391 = vmatpush.bf16.msra.mxu0 0
        %392 = vmatpush.bf16.msra.mxu0 0
        %393 = vmatpush.bf16.msra.mxu0 0
        %394 = vmatpush.bf16.msra.mxu0 0
        %395 = vmatpush.bf16.msra.mxu0 %v388
        %396 = vmatpush.bf16.msra.mxu0 %v333
        %397 = vmatpush.bf16.msra.mxu0 %v332
        %398 = vmatmul.bf16.gmra.mxu0 %v339
        %v399 = vpop.f32.mrf.mxu0
        %v400 = vadd.f32 %v240, %v399
        %v401 = vpop.f32.mrf.mxu0
        %v402 = vadd.f32 %v240, %v401
        %403 = vmatmul.bf16.gmra.mxu0 %v342
        %v404 = vpop.f32.mrf.mxu0
        %v405 = vadd.f32 %v240, %v404
        %v406 = vpop.f32.mrf.mxu0
        %v407 = vadd.f32 %v240, %v406
        %408 = vmatmul.bf16.gmra.mxu0 %v345
        %v409 = vpop.f32.mrf.mxu0
        %v410 = vadd.f32 %v240, %v409
        %v411 = vpop.f32.mrf.mxu0
        %v412 = vadd.f32 %v240, %v411
        %413 = vmatmul.bf16.gmra.mxu0 %v348
        %v414 = vpop.f32.mrf.mxu0
        %v415 = vadd.f32 %v240, %v414
        %v416 = vpop.f32.mrf.mxu0
        %v417 = vadd.f32 %v240, %v416
        %418 = vmatmul.bf16.gmra.mxu0 %v351
        %v419 = vpop.f32.mrf.mxu0
        %v420 = vadd.f32 %v240, %v419
        %v421 = vpop.f32.mrf.mxu0
        %v422 = vadd.f32 %v240, %v421
        %423 = vmatmul.bf16.gmra.mxu0 %v354
        %v424 = vpop.f32.mrf.mxu0
        %v425 = vadd.f32 %v240, %v424
        %v426 = vpop.f32.mrf.mxu0
        %v427 = vadd.f32 %v240, %v426
        %428 = vmatmul.bf16.gmra.mxu0 %v357
        %v429 = vpop.f32.mrf.mxu0
        %v430 = vadd.f32 %v240, %v429
        %v431 = vpop.f32.mrf.mxu0
        %v432 = vadd.f32 %v240, %v431
        %433 = vmatmul.bf16.gmra.mxu0 %v360
        %v434 = vpop.f32.mrf.mxu0
        %v435 = vadd.f32 %v240, %v434
        %v436 = vpop.f32.mrf.mxu0
        %v437 = vadd.f32 %v240, %v436
        %438 = vmatmul.bf16.gmra.mxu0 %v363
        %v439 = vpop.f32.mrf.mxu0
        %v440 = vadd.f32 %v240, %v439
        %v441 = vpop.f32.mrf.mxu0
        %v442 = vadd.f32 %v240, %v441
        %443 = vmatmul.bf16.gmra.mxu0 %v366
        %v444 = vpop.f32.mrf.mxu0
        %v445 = vadd.f32 %v240, %v444
        %v446 = vpop.f32.mrf.mxu0
        %v447 = vadd.f32 %v240, %v446
        %448 = vmatmul.bf16.gmra.mxu0 %v369
        %v449 = vpop.f32.mrf.mxu0
        %v450 = vadd.f32 %v240, %v449
        %v451 = vpop.f32.mrf.mxu0
        %v452 = vadd.f32 %v240, %v451
        %453 = vmatmul.bf16.gmra.mxu0 %v372
        %v454 = vpop.f32.mrf.mxu0
        %v455 = vadd.f32 %v240, %v454
        %v456 = vpop.f32.mrf.mxu0
        %v457 = vadd.f32 %v240, %v456
        %458 = vmatmul.bf16.gmra.mxu0 %v375
        %v459 = vpop.f32.mrf.mxu0
        %v460 = vadd.f32 %v240, %v459
        %v461 = vpop.f32.mrf.mxu0
        %v462 = vadd.f32 %v240, %v461
        %463 = vmatmul.bf16.gmra.mxu0 %v378
        %v464 = vpop.f32.mrf.mxu0
        %v465 = vadd.f32 %v240, %v464
        %v466 = vpop.f32.mrf.mxu0
        %v467 = vadd.f32 %v240, %v466
        %468 = vmatmul.bf16.gmra.mxu0 %v381
        %v469 = vpop.f32.mrf.mxu0
        %v470 = vadd.f32 %v240, %v469
        %v471 = vpop.f32.mrf.mxu0
        %v472 = vadd.f32 %v240, %v471
        %473 = vmatmul.bf16.gmra.mxu0 %v384
        %v474 = vpop.f32.mrf.mxu0
        %v475 = vadd.f32 %v240, %v474
        %v476 = vpop.f32.mrf.mxu0
        %v477 = vadd.f32 %v240, %v476
        %478 = vdwg.mxu0
        %v479 = vmul.f32 %v400, %v400
        %v480 = vmul.f32 %v402, %v402
        %v481 = vmul.f32 %v405, %v405
        %v482 = vmul.f32 %v407, %v407
        %v483 = vmul.f32 %v410, %v410
        %v484 = vmul.f32 %v412, %v412
        %v485 = vmul.f32 %v415, %v415
        %v486 = vmul.f32 %v417, %v417
        %v487 = vmul.f32 %v420, %v420
        %v488 = vmul.f32 %v422, %v422
        %v489 = vmul.f32 %v425, %v425
        %v490 = vmul.f32 %v427, %v427
        %v491 = vmul.f32 %v430, %v430
        %v492 = vmul.f32 %v432, %v432
        %v493 = vmul.f32 %v435, %v435
        %v494 = vmul.f32 %v437, %v437
        %v495 = vmul.f32 %v440, %v440
        %v496 = vmul.f32 %v442, %v442
        %v497 = vmul.f32 %v445, %v445
        %v498 = vmul.f32 %v447, %v447
        %v499 = vmul.f32 %v450, %v450
        %v500 = vmul.f32 %v452, %v452
        %v501 = vmul.f32 %v455, %v455
        %v502 = vmul.f32 %v457, %v457
        %v503 = vmul.f32 %v460, %v460
        %v504 = vmul.f32 %v462, %v462
        %v505 = vmul.f32 %v465, %v465
        %v506 = vmul.f32 %v467, %v467
        %v507 = vmul.f32 %v470, %v470
        %v508 = vmul.f32 %v472, %v472
        %v509 = vmul.f32 %v475, %v475
        %v510 = vmul.f32 %v477, %v477
        %511 = vadd.xlane.f32.xlu0 %v479
        %v512 = vpop.xlane.xlu0 %511
        %513 = vadd.xlane.f32.xlu0 %v480
        %v514 = vpop.xlane.xlu0 %513
        %515 = vadd.xlane.f32.xlu0 %v481
        %v516 = vpop.xlane.xlu0 %515
        %517 = vadd.xlane.f32.xlu0 %v482
        %v518 = vpop.xlane.xlu0 %517
        %519 = vadd.xlane.f32.xlu0 %v483
        %v520 = vpop.xlane.xlu0 %519
        %521 = vadd.xlane.f32.xlu0 %v484
        %v522 = vpop.xlane.xlu0 %521
        %523 = vadd.xlane.f32.xlu0 %v485
        %v524 = vpop.xlane.xlu0 %523
        %525 = vadd.xlane.f32.xlu0 %v486
        %v526 = vpop.xlane.xlu0 %525
        %527 = vadd.xlane.f32.xlu0 %v487
        %v528 = vpop.xlane.xlu0 %527
        %529 = vadd.xlane.f32.xlu0 %v488
        %v530 = vpop.xlane.xlu0 %529
        %531 = vadd.xlane.f32.xlu0 %v489
        %v532 = vpop.xlane.xlu0 %531
        %533 = vadd.xlane.f32.xlu0 %v490
        %v534 = vpop.xlane.xlu0 %533
        %535 = vadd.xlane.f32.xlu0 %v491
        %v536 = vpop.xlane.xlu0 %535
        %537 = vadd.xlane.f32.xlu0 %v492
        %v538 = vpop.xlane.xlu0 %537
        %539 = vadd.xlane.f32.xlu0 %v493
        %v540 = vpop.xlane.xlu0 %539
        %541 = vadd.xlane.f32.xlu0 %v494
        %v542 = vpop.xlane.xlu0 %541
        %543 = vadd.xlane.f32.xlu0 %v495
        %v544 = vpop.xlane.xlu0 %543
        %545 = vadd.xlane.f32.xlu0 %v496
        %v546 = vpop.xlane.xlu0 %545
        %547 = vadd.xlane.f32.xlu0 %v497
        %v548 = vpop.xlane.xlu0 %547
        %549 = vadd.xlane.f32.xlu0 %v498
        %v550 = vpop.xlane.xlu0 %549
        %551 = vadd.xlane.f32.xlu0 %v499
        %v552 = vpop.xlane.xlu0 %551
        %553 = vadd.xlane.f32.xlu0 %v500
        %v554 = vpop.xlane.xlu0 %553
        %555 = vadd.xlane.f32.xlu0 %v501
        %v556 = vpop.xlane.xlu0 %555
        %557 = vadd.xlane.f32.xlu0 %v502
        %v558 = vpop.xlane.xlu0 %557
        %559 = vadd.xlane.f32.xlu0 %v503
        %v560 = vpop.xlane.xlu0 %559
        %561 = vadd.xlane.f32.xlu0 %v504
        %v562 = vpop.xlane.xlu0 %561
        %563 = vadd.xlane.f32.xlu0 %v505
        %v564 = vpop.xlane.xlu0 %563
        %565 = vadd.xlane.f32.xlu0 %v506
        %v566 = vpop.xlane.xlu0 %565
        %567 = vadd.xlane.f32.xlu0 %v507
        %v568 = vpop.xlane.xlu0 %567
        %569 = vadd.xlane.f32.xlu0 %v508
        %v570 = vpop.xlane.xlu0 %569
        %571 = vadd.xlane.f32.xlu0 %v509
        %v572 = vpop.xlane.xlu0 %571
        %573 = vadd.xlane.f32.xlu0 %v510
        %v574 = vpop.xlane.xlu0 %573
        %v575 = vmul.f32 %v512, 0.125
        %v576 = vmul.f32 %v514, 0.125
        %v577 = vmul.f32 %v516, 0.125
        %v578 = vmul.f32 %v518, 0.125
        %v579 = vmul.f32 %v520, 0.125
        %v580 = vmul.f32 %v522, 0.125
        %v581 = vmul.f32 %v524, 0.125
        %v582 = vmul.f32 %v526, 0.125
        %v583 = vmul.f32 %v528, 0.125
        %v584 = vmul.f32 %v530, 0.125
        %v585 = vmul.f32 %v532, 0.125
        %v586 = vmul.f32 %v534, 0.125
        %v587 = vmul.f32 %v536, 0.125
        %v588 = vmul.f32 %v538, 0.125
        %v589 = vmul.f32 %v540, 0.125
        %v590 = vmul.f32 %v542, 0.125
        %v591 = vmul.f32 %v544, 0.125
        %v592 = vmul.f32 %v546, 0.125
        %v593 = vmul.f32 %v548, 0.125
        %v594 = vmul.f32 %v550, 0.125
        %v595 = vmul.f32 %v552, 0.125
        %v596 = vmul.f32 %v554, 0.125
        %v597 = vmul.f32 %v556, 0.125
        %v598 = vmul.f32 %v558, 0.125
        %v599 = vmul.f32 %v560, 0.125
        %v600 = vmul.f32 %v562, 0.125
        %v601 = vmul.f32 %v564, 0.125
        %v602 = vmul.f32 %v566, 0.125
        %v603 = vmul.f32 %v568, 0.125
        %v604 = vmul.f32 %v570, 0.125
        %v605 = vmul.f32 %v572, 0.125
        %v606 = vmul.f32 %v574, 0.125
        %v607 = vadd.f32 %v575, 1e-08
        %v608 = vadd.f32 %v576, 1e-08
        %v609 = vadd.f32 %v577, 1e-08
        %v610 = vadd.f32 %v578, 1e-08
        %v611 = vadd.f32 %v579, 1e-08
        %v612 = vadd.f32 %v580, 1e-08
        %v613 = vadd.f32 %v581, 1e-08
        %v614 = vadd.f32 %v582, 1e-08
        %v615 = vadd.f32 %v583, 1e-08
        %v616 = vadd.f32 %v584, 1e-08
        %v617 = vadd.f32 %v585, 1e-08
        %v618 = vadd.f32 %v586, 1e-08
        %v619 = vadd.f32 %v587, 1e-08
        %v620 = vadd.f32 %v588, 1e-08
        %v621 = vadd.f32 %v589, 1e-08
        %v622 = vadd.f32 %v590, 1e-08
        %v623 = vadd.f32 %v591, 1e-08
        %v624 = vadd.f32 %v592, 1e-08
        %v625 = vadd.f32 %v593, 1e-08
        %v626 = vadd.f32 %v594, 1e-08
        %v627 = vadd.f32 %v595, 1e-08
        %v628 = vadd.f32 %v596, 1e-08
        %v629 = vadd.f32 %v597, 1e-08
        %v630 = vadd.f32 %v598, 1e-08
        %v631 = vadd.f32 %v599, 1e-08
        %v632 = vadd.f32 %v600, 1e-08
        %v633 = vadd.f32 %v601, 1e-08
        %v634 = vadd.f32 %v602, 1e-08
        %v635 = vadd.f32 %v603, 1e-08
        %v636 = vadd.f32 %v604, 1e-08
        %v637 = vadd.f32 %v605, 1e-08
        %v638 = vadd.f32 %v606, 1e-08
        %v639 = vrsqrt.pop %v607
        %v640 = vmul.f32 %v639, %v607
        %v641 = vmul.f32 %v640, %v639
        %v642 = vmul.f32 0.5, %v641
        %v643 = vsub.f32 1.5, %v642
        %v644 = vmul.f32 %v639, %v643
        %vm645 = vweird.f32 %v607
        %vm646 = vweird.f32 %v639
        %vm647 = vmor %vm645, %vm646
        %v648 = vsel %vm647, %v639, %v644
        %v649 = vrsqrt.pop %v608
        %v650 = vmul.f32 %v649, %v608
        %v651 = vmul.f32 %v650, %v649
        %v652 = vmul.f32 0.5, %v651
        %v653 = vsub.f32 1.5, %v652
        %v654 = vmul.f32 %v649, %v653
        %vm655 = vweird.f32 %v608
        %vm656 = vweird.f32 %v649
        %vm657 = vmor %vm655, %vm656
        %v658 = vsel %vm657, %v649, %v654
        %v659 = vrsqrt.pop %v609
        %v660 = vmul.f32 %v659, %v609
        %v661 = vmul.f32 %v660, %v659
        %v662 = vmul.f32 0.5, %v661
        %v663 = vsub.f32 1.5, %v662
        %v664 = vmul.f32 %v659, %v663
        %vm665 = vweird.f32 %v609
        %vm666 = vweird.f32 %v659
        %vm667 = vmor %vm665, %vm666
        %v668 = vsel %vm667, %v659, %v664
        %v669 = vrsqrt.pop %v610
        %v670 = vmul.f32 %v669, %v610
        %v671 = vmul.f32 %v670, %v669
        %v672 = vmul.f32 0.5, %v671
        %v673 = vsub.f32 1.5, %v672
        %v674 = vmul.f32 %v669, %v673
        %vm675 = vweird.f32 %v610
        %vm676 = vweird.f32 %v669
        %vm677 = vmor %vm675, %vm676
        %v678 = vsel %vm677, %v669, %v674
        %v679 = vrsqrt.pop %v611
        %v680 = vmul.f32 %v679, %v611
        %v681 = vmul.f32 %v680, %v679
        %v682 = vmul.f32 0.5, %v681
        %v683 = vsub.f32 1.5, %v682
        %v684 = vmul.f32 %v679, %v683
        %vm685 = vweird.f32 %v611
        %vm686 = vweird.f32 %v679
        %vm687 = vmor %vm685, %vm686
        %v688 = vsel %vm687, %v679, %v684
        %v689 = vrsqrt.pop %v612
        %v690 = vmul.f32 %v689, %v612
        %v691 = vmul.f32 %v690, %v689
        %v692 = vmul.f32 0.5, %v691
        %v693 = vsub.f32 1.5, %v692
        %v694 = vmul.f32 %v689, %v693
        %vm695 = vweird.f32 %v612
        %vm696 = vweird.f32 %v689
        %vm697 = vmor %vm695, %vm696
        %v698 = vsel %vm697, %v689, %v694
        %v699 = vrsqrt.pop %v613
        %v700 = vmul.f32 %v699, %v613
        %v701 = vmul.f32 %v700, %v699
        %v702 = vmul.f32 0.5, %v701
        %v703 = vsub.f32 1.5, %v702
        %v704 = vmul.f32 %v699, %v703
        %vm705 = vweird.f32 %v613
        %vm706 = vweird.f32 %v699
        %vm707 = vmor %vm705, %vm706
        %v708 = vsel %vm707, %v699, %v704
        %v709 = vrsqrt.pop %v614
        %v710 = vmul.f32 %v709, %v614
        %v711 = vmul.f32 %v710, %v709
        %v712 = vmul.f32 0.5, %v711
        %v713 = vsub.f32 1.5, %v712
        %v714 = vmul.f32 %v709, %v713
        %vm715 = vweird.f32 %v614
        %vm716 = vweird.f32 %v709
        %vm717 = vmor %vm715, %vm716
        %v718 = vsel %vm717, %v709, %v714
        %v719 = vrsqrt.pop %v615
        %v720 = vmul.f32 %v719, %v615
        %v721 = vmul.f32 %v720, %v719
        %v722 = vmul.f32 0.5, %v721
        %v723 = vsub.f32 1.5, %v722
        %v724 = vmul.f32 %v719, %v723
        %vm725 = vweird.f32 %v615
        %vm726 = vweird.f32 %v719
        %vm727 = vmor %vm725, %vm726
        %v728 = vsel %vm727, %v719, %v724
        %v729 = vrsqrt.pop %v616
        %v730 = vmul.f32 %v729, %v616
        %v731 = vmul.f32 %v730, %v729
        %v732 = vmul.f32 0.5, %v731
        %v733 = vsub.f32 1.5, %v732
        %v734 = vmul.f32 %v729, %v733
        %vm735 = vweird.f32 %v616
        %vm736 = vweird.f32 %v729
        %vm737 = vmor %vm735, %vm736
        %v738 = vsel %vm737, %v729, %v734
        %v739 = vrsqrt.pop %v617
        %v740 = vmul.f32 %v739, %v617
        %v741 = vmul.f32 %v740, %v739
        %v742 = vmul.f32 0.5, %v741
        %v743 = vsub.f32 1.5, %v742
        %v744 = vmul.f32 %v739, %v743
        %vm745 = vweird.f32 %v617
        %vm746 = vweird.f32 %v739
        %vm747 = vmor %vm745, %vm746
        %v748 = vsel %vm747, %v739, %v744
        %v749 = vrsqrt.pop %v618
        %v750 = vmul.f32 %v749, %v618
        %v751 = vmul.f32 %v750, %v749
        %v752 = vmul.f32 0.5, %v751
        %v753 = vsub.f32 1.5, %v752
        %v754 = vmul.f32 %v749, %v753
        %vm755 = vweird.f32 %v618
        %vm756 = vweird.f32 %v749
        %vm757 = vmor %vm755, %vm756
        %v758 = vsel %vm757, %v749, %v754
        %v759 = vrsqrt.pop %v619
        %v760 = vmul.f32 %v759, %v619
        %v761 = vmul.f32 %v760, %v759
        %v762 = vmul.f32 0.5, %v761
        %v763 = vsub.f32 1.5, %v762
        %v764 = vmul.f32 %v759, %v763
        %vm765 = vweird.f32 %v619
        %vm766 = vweird.f32 %v759
        %vm767 = vmor %vm765, %vm766
        %v768 = vsel %vm767, %v759, %v764
        %v769 = vrsqrt.pop %v620
        %v770 = vmul.f32 %v769, %v620
        %v771 = vmul.f32 %v770, %v769
        %v772 = vmul.f32 0.5, %v771
        %v773 = vsub.f32 1.5, %v772
        %v774 = vmul.f32 %v769, %v773
        %vm775 = vweird.f32 %v620
        %vm776 = vweird.f32 %v769
        %vm777 = vmor %vm775, %vm776
        %v778 = vsel %vm777, %v769, %v774
        %v779 = vrsqrt.pop %v621
        %v780 = vmul.f32 %v779, %v621
        %v781 = vmul.f32 %v780, %v779
        %v782 = vmul.f32 0.5, %v781
        %v783 = vsub.f32 1.5, %v782
        %v784 = vmul.f32 %v779, %v783
        %vm785 = vweird.f32 %v621
        %vm786 = vweird.f32 %v779
        %vm787 = vmor %vm785, %vm786
        %v788 = vsel %vm787, %v779, %v784
        %v789 = vrsqrt.pop %v622
        %v790 = vmul.f32 %v789, %v622
        %v791 = vmul.f32 %v790, %v789
        %v792 = vmul.f32 0.5, %v791
        %v793 = vsub.f32 1.5, %v792
        %v794 = vmul.f32 %v789, %v793
        %vm795 = vweird.f32 %v622
        %vm796 = vweird.f32 %v789
        %vm797 = vmor %vm795, %vm796
        %v798 = vsel %vm797, %v789, %v794
        %v799 = vrsqrt.pop %v623
        %v800 = vmul.f32 %v799, %v623
        %v801 = vmul.f32 %v800, %v799
        %v802 = vmul.f32 0.5, %v801
        %v803 = vsub.f32 1.5, %v802
        %v804 = vmul.f32 %v799, %v803
        %vm805 = vweird.f32 %v623
        %vm806 = vweird.f32 %v799
        %vm807 = vmor %vm805, %vm806
        %v808 = vsel %vm807, %v799, %v804
        %v809 = vrsqrt.pop %v624
        %v810 = vmul.f32 %v809, %v624
        %v811 = vmul.f32 %v810, %v809
        %v812 = vmul.f32 0.5, %v811
        %v813 = vsub.f32 1.5, %v812
        %v814 = vmul.f32 %v809, %v813
        %vm815 = vweird.f32 %v624
        %vm816 = vweird.f32 %v809
        %vm817 = vmor %vm815, %vm816
        %v818 = vsel %vm817, %v809, %v814
        %v819 = vrsqrt.pop %v625
        %v820 = vmul.f32 %v819, %v625
        %v821 = vmul.f32 %v820, %v819
        %v822 = vmul.f32 0.5, %v821
        %v823 = vsub.f32 1.5, %v822
        %v824 = vmul.f32 %v819, %v823
        %vm825 = vweird.f32 %v625
        %vm826 = vweird.f32 %v819
        %vm827 = vmor %vm825, %vm826
        %v828 = vsel %vm827, %v819, %v824
        %v829 = vrsqrt.pop %v626
        %v830 = vmul.f32 %v829, %v626
        %v831 = vmul.f32 %v830, %v829
        %v832 = vmul.f32 0.5, %v831
        %v833 = vsub.f32 1.5, %v832
        %v834 = vmul.f32 %v829, %v833
        %vm835 = vweird.f32 %v626
        %vm836 = vweird.f32 %v829
        %vm837 = vmor %vm835, %vm836
        %v838 = vsel %vm837, %v829, %v834
        %v839 = vrsqrt.pop %v627
        %v840 = vmul.f32 %v839, %v627
        %v841 = vmul.f32 %v840, %v839
        %v842 = vmul.f32 0.5, %v841
        %v843 = vsub.f32 1.5, %v842
        %v844 = vmul.f32 %v839, %v843
        %vm845 = vweird.f32 %v627
        %vm846 = vweird.f32 %v839
        %vm847 = vmor %vm845, %vm846
        %v848 = vsel %vm847, %v839, %v844
        %v849 = vrsqrt.pop %v628
        %v850 = vmul.f32 %v849, %v628
        %v851 = vmul.f32 %v850, %v849
        %v852 = vmul.f32 0.5, %v851
        %v853 = vsub.f32 1.5, %v852
        %v854 = vmul.f32 %v849, %v853
        %vm855 = vweird.f32 %v628
        %vm856 = vweird.f32 %v849
        %vm857 = vmor %vm855, %vm856
        %v858 = vsel %vm857, %v849, %v854
        %v859 = vrsqrt.pop %v629
        %v860 = vmul.f32 %v859, %v629
        %v861 = vmul.f32 %v860, %v859
        %v862 = vmul.f32 0.5, %v861
        %v863 = vsub.f32 1.5, %v862
        %v864 = vmul.f32 %v859, %v863
        %vm865 = vweird.f32 %v629
        %vm866 = vweird.f32 %v859
        %vm867 = vmor %vm865, %vm866
        %v868 = vsel %vm867, %v859, %v864
        %v869 = vrsqrt.pop %v630
        %v870 = vmul.f32 %v869, %v630
        %v871 = vmul.f32 %v870, %v869
        %v872 = vmul.f32 0.5, %v871
        %v873 = vsub.f32 1.5, %v872
        %v874 = vmul.f32 %v869, %v873
        %vm875 = vweird.f32 %v630
        %vm876 = vweird.f32 %v869
        %vm877 = vmor %vm875, %vm876
        %v878 = vsel %vm877, %v869, %v874
        %v879 = vrsqrt.pop %v631
        %v880 = vmul.f32 %v879, %v631
        %v881 = vmul.f32 %v880, %v879
        %v882 = vmul.f32 0.5, %v881
        %v883 = vsub.f32 1.5, %v882
        %v884 = vmul.f32 %v879, %v883
        %vm885 = vweird.f32 %v631
        %vm886 = vweird.f32 %v879
        %vm887 = vmor %vm885, %vm886
        %v888 = vsel %vm887, %v879, %v884
        %v889 = vrsqrt.pop %v632
        %v890 = vmul.f32 %v889, %v632
        %v891 = vmul.f32 %v890, %v889
        %v892 = vmul.f32 0.5, %v891
        %v893 = vsub.f32 1.5, %v892
        %v894 = vmul.f32 %v889, %v893
        %vm895 = vweird.f32 %v632
        %vm896 = vweird.f32 %v889
        %vm897 = vmor %vm895, %vm896
        %v898 = vsel %vm897, %v889, %v894
        %v899 = vrsqrt.pop %v633
        %v900 = vmul.f32 %v899, %v633
        %v901 = vmul.f32 %v900, %v899
        %v902 = vmul.f32 0.5, %v901
        %v903 = vsub.f32 1.5, %v902
        %v904 = vmul.f32 %v899, %v903
        %vm905 = vweird.f32 %v633
        %vm906 = vweird.f32 %v899
        %vm907 = vmor %vm905, %vm906
        %v908 = vsel %vm907, %v899, %v904
        %v909 = vrsqrt.pop %v634
        %v910 = vmul.f32 %v909, %v634
        %v911 = vmul.f32 %v910, %v909
        %v912 = vmul.f32 0.5, %v911
        %v913 = vsub.f32 1.5, %v912
        %v914 = vmul.f32 %v909, %v913
        %vm915 = vweird.f32 %v634
        %vm916 = vweird.f32 %v909
        %vm917 = vmor %vm915, %vm916
        %v918 = vsel %vm917, %v909, %v914
        %v919 = vrsqrt.pop %v635
        %v920 = vmul.f32 %v919, %v635
        %v921 = vmul.f32 %v920, %v919
        %v922 = vmul.f32 0.5, %v921
        %v923 = vsub.f32 1.5, %v922
        %v924 = vmul.f32 %v919, %v923
        %vm925 = vweird.f32 %v635
        %vm926 = vweird.f32 %v919
        %vm927 = vmor %vm925, %vm926
        %v928 = vsel %vm927, %v919, %v924
        %v929 = vrsqrt.pop %v636
        %v930 = vmul.f32 %v929, %v636
        %v931 = vmul.f32 %v930, %v929
        %v932 = vmul.f32 0.5, %v931
        %v933 = vsub.f32 1.5, %v932
        %v934 = vmul.f32 %v929, %v933
        %vm935 = vweird.f32 %v636
        %vm936 = vweird.f32 %v929
        %vm937 = vmor %vm935, %vm936
        %v938 = vsel %vm937, %v929, %v934
        %v939 = vrsqrt.pop %v637
        %v940 = vmul.f32 %v939, %v637
        %v941 = vmul.f32 %v940, %v939
        %v942 = vmul.f32 0.5, %v941
        %v943 = vsub.f32 1.5, %v942
        %v944 = vmul.f32 %v939, %v943
        %vm945 = vweird.f32 %v637
        %vm946 = vweird.f32 %v939
        %vm947 = vmor %vm945, %vm946
        %v948 = vsel %vm947, %v939, %v944
        %v949 = vrsqrt.pop %v638
        %v950 = vmul.f32 %v949, %v638
        %v951 = vmul.f32 %v950, %v949
        %v952 = vmul.f32 0.5, %v951
        %v953 = vsub.f32 1.5, %v952
        %v954 = vmul.f32 %v949, %v953
        %vm955 = vweird.f32 %v638
        %vm956 = vweird.f32 %v949
        %vm957 = vmor %vm955, %vm956
        %v958 = vsel %vm957, %v949, %v954
        %v959 = vmul.f32 %v400, %v648
        %v960 = vmul.f32 %v402, %v658
        %v961 = vmul.f32 %v405, %v668
        %v962 = vmul.f32 %v407, %v678
        %v963 = vmul.f32 %v410, %v688
        %v964 = vmul.f32 %v412, %v698
        %v965 = vmul.f32 %v415, %v708
        %v966 = vmul.f32 %v417, %v718
        %v967 = vmul.f32 %v420, %v728
        %v968 = vmul.f32 %v422, %v738
        %v969 = vmul.f32 %v425, %v748
        %v970 = vmul.f32 %v427, %v758
        %v971 = vmul.f32 %v430, %v768
        %v972 = vmul.f32 %v432, %v778
        %v973 = vmul.f32 %v435, %v788
        %v974 = vmul.f32 %v437, %v798
        %v975 = vmul.f32 %v440, %v808
        %v976 = vmul.f32 %v442, %v818
        %v977 = vmul.f32 %v445, %v828
        %v978 = vmul.f32 %v447, %v838
        %v979 = vmul.f32 %v450, %v848
        %v980 = vmul.f32 %v452, %v858
        %v981 = vmul.f32 %v455, %v868
        %v982 = vmul.f32 %v457, %v878
        %v983 = vmul.f32 %v460, %v888
        %v984 = vmul.f32 %v462, %v898
        %v985 = vmul.f32 %v465, %v908
        %v986 = vmul.f32 %v467, %v918
        %v987 = vmul.f32 %v470, %v928
        %v988 = vmul.f32 %v472, %v938
        %v989 = vmul.f32 %v475, %v948
        %v990 = vmul.f32 %v477, %v958
        %vm991 = vcmp.ge.f32.partialorder %v959, 0.0
        %vm992 = vcmp.ge.f32.partialorder %v960, 0.0
        %vm993 = vcmp.ge.f32.partialorder %v961, 0.0
        %vm994 = vcmp.ge.f32.partialorder %v962, 0.0
        %vm995 = vcmp.ge.f32.partialorder %v963, 0.0
        %vm996 = vcmp.ge.f32.partialorder %v964, 0.0
        %vm997 = vcmp.ge.f32.partialorder %v965, 0.0
        %vm998 = vcmp.ge.f32.partialorder %v966, 0.0
        %vm999 = vcmp.ge.f32.partialorder %v967, 0.0
        %vm1000 = vcmp.ge.f32.partialorder %v968, 0.0
        %vm1001 = vcmp.ge.f32.partialorder %v969, 0.0
        %vm1002 = vcmp.ge.f32.partialorder %v970, 0.0
        %vm1003 = vcmp.ge.f32.partialorder %v971, 0.0
        %vm1004 = vcmp.ge.f32.partialorder %v972, 0.0
        %vm1005 = vcmp.ge.f32.partialorder %v973, 0.0
        %vm1006 = vcmp.ge.f32.partialorder %v974, 0.0
        %vm1007 = vcmp.ge.f32.partialorder %v975, 0.0
        %vm1008 = vcmp.ge.f32.partialorder %v976, 0.0
        %vm1009 = vcmp.ge.f32.partialorder %v977, 0.0
        %vm1010 = vcmp.ge.f32.partialorder %v978, 0.0
        %vm1011 = vcmp.ge.f32.partialorder %v979, 0.0
        %vm1012 = vcmp.ge.f32.partialorder %v980, 0.0
        %vm1013 = vcmp.ge.f32.partialorder %v981, 0.0
        %vm1014 = vcmp.ge.f32.partialorder %v982, 0.0
        %vm1015 = vcmp.ge.f32.partialorder %v983, 0.0
        %vm1016 = vcmp.ge.f32.partialorder %v984, 0.0
        %vm1017 = vcmp.ge.f32.partialorder %v985, 0.0
        %vm1018 = vcmp.ge.f32.partialorder %v986, 0.0
        %vm1019 = vcmp.ge.f32.partialorder %v987, 0.0
        %vm1020 = vcmp.ge.f32.partialorder %v988, 0.0
        %vm1021 = vcmp.ge.f32.partialorder %v989, 0.0
        %vm1022 = vcmp.ge.f32.partialorder %v990, 0.0
        %v1023 = vmul.f32 %v959, 0.2
        %v1024 = vmul.f32 %v960, 0.2
        %v1025 = vmul.f32 %v961, 0.2
        %v1026 = vmul.f32 %v962, 0.2
        %v1027 = vmul.f32 %v963, 0.2
        %v1028 = vmul.f32 %v964, 0.2
        %v1029 = vmul.f32 %v965, 0.2
        %v1030 = vmul.f32 %v966, 0.2
        %v1031 = vmul.f32 %v967, 0.2
        %v1032 = vmul.f32 %v968, 0.2
        %v1033 = vmul.f32 %v969, 0.2
        %v1034 = vmul.f32 %v970, 0.2
        %v1035 = vmul.f32 %v971, 0.2
        %v1036 = vmul.f32 %v972, 0.2
        %v1037 = vmul.f32 %v973, 0.2
        %v1038 = vmul.f32 %v974, 0.2
        %v1039 = vmul.f32 %v975, 0.2
        %v1040 = vmul.f32 %v976, 0.2
        %v1041 = vmul.f32 %v977, 0.2
        %v1042 = vmul.f32 %v978, 0.2
        %v1043 = vmul.f32 %v979, 0.2
        %v1044 = vmul.f32 %v980, 0.2
        %v1045 = vmul.f32 %v981, 0.2
        %v1046 = vmul.f32 %v982, 0.2
        %v1047 = vmul.f32 %v983, 0.2
        %v1048 = vmul.f32 %v984, 0.2
        %v1049 = vmul.f32 %v985, 0.2
        %v1050 = vmul.f32 %v986, 0.2
        %v1051 = vmul.f32 %v987, 0.2
        %v1052 = vmul.f32 %v988, 0.2
        %v1053 = vmul.f32 %v989, 0.2
        %v1054 = vmul.f32 %v990, 0.2
        %v1055 = vsel %vm991, %v959, %v1023
        %v1056 = vsel %vm992, %v960, %v1024
        %v1057 = vsel %vm993, %v961, %v1025
        %v1058 = vsel %vm994, %v962, %v1026
        %v1059 = vsel %vm995, %v963, %v1027
        %v1060 = vsel %vm996, %v964, %v1028
        %v1061 = vsel %vm997, %v965, %v1029
        %v1062 = vsel %vm998, %v966, %v1030
        %v1063 = vsel %vm999, %v967, %v1031
        %v1064 = vsel %vm1000, %v968, %v1032
        %v1065 = vsel %vm1001, %v969, %v1033
        %v1066 = vsel %vm1002, %v970, %v1034
        %v1067 = vsel %vm1003, %v971, %v1035
        %v1068 = vsel %vm1004, %v972, %v1036
        %v1069 = vsel %vm1005, %v973, %v1037
        %v1070 = vsel %vm1006, %v974, %v1038
        %v1071 = vsel %vm1007, %v975, %v1039
        %v1072 = vsel %vm1008, %v976, %v1040
        %v1073 = vsel %vm1009, %v977, %v1041
        %v1074 = vsel %vm1010, %v978, %v1042
        %v1075 = vsel %vm1011, %v979, %v1043
        %v1076 = vsel %vm1012, %v980, %v1044
        %v1077 = vsel %vm1013, %v981, %v1045
        %v1078 = vsel %vm1014, %v982, %v1046
        %v1079 = vsel %vm1015, %v983, %v1047
        %v1080 = vsel %vm1016, %v984, %v1048
        %v1081 = vsel %vm1017, %v985, %v1049
        %v1082 = vsel %vm1018, %v986, %v1050
        %v1083 = vsel %vm1019, %v987, %v1051
        %v1084 = vsel %vm1020, %v988, %v1052
        %v1085 = vsel %vm1021, %v989, %v1053
        %v1086 = vsel %vm1022, %v990, %v1054
        %v1087 = vpack.c.bf16 %v1055, %v1055
        %v1088 = vpack.c.bf16 %v1056, %v1056
        %v1089 = vpack.c.bf16 %v1057, %v1057
        %v1090 = vpack.c.bf16 %v1058, %v1058
        %v1091 = vpack.c.bf16 %v1059, %v1059
        %v1092 = vpack.c.bf16 %v1060, %v1060
        %v1093 = vpack.c.bf16 %v1061, %v1061
        %v1094 = vpack.c.bf16 %v1062, %v1062
        %v1095 = vpack.c.bf16 %v1063, %v1063
        %v1096 = vpack.c.bf16 %v1064, %v1064
        %v1097 = vpack.c.bf16 %v1065, %v1065
        %v1098 = vpack.c.bf16 %v1066, %v1066
        %v1099 = vpack.c.bf16 %v1067, %v1067
        %v1100 = vpack.c.bf16 %v1068, %v1068
        %v1101 = vpack.c.bf16 %v1069, %v1069
        %v1102 = vpack.c.bf16 %v1070, %v1070
        %v1103 = vpack.c.bf16 %v1071, %v1071
        %v1104 = vpack.c.bf16 %v1072, %v1072
        %v1105 = vpack.c.bf16 %v1073, %v1073
        %v1106 = vpack.c.bf16 %v1074, %v1074
        %v1107 = vpack.c.bf16 %v1075, %v1075
        %v1108 = vpack.c.bf16 %v1076, %v1076
        %v1109 = vpack.c.bf16 %v1077, %v1077
        %v1110 = vpack.c.bf16 %v1078, %v1078
        %v1111 = vpack.c.bf16 %v1079, %v1079
        %v1112 = vpack.c.bf16 %v1080, %v1080
        %v1113 = vpack.c.bf16 %v1081, %v1081
        %v1114 = vpack.c.bf16 %v1082, %v1082
        %v1115 = vpack.c.bf16 %v1083, %v1083
        %v1116 = vpack.c.bf16 %v1084, %v1084
        %v1117 = vpack.c.bf16 %v1085, %v1085
        %v1118 = vpack.c.bf16 %v1086, %v1086
        %1119 = vst [vmem:[%s188] sm:$0xf] %v1087
        %1120 = vst [vmem:[%s188 + $0x4] sm:$0xf] %v1088
        %1121 = vst [vmem:[%s188 + $0x8] sm:$0xf] %v1089
        %1122 = vst [vmem:[%s188 + $0xc] sm:$0xf] %v1090
        %1123 = vst [vmem:[%s188 + $0x10] sm:$0xf] %v1091
        %1124 = vst [vmem:[%s188 + $0x14] sm:$0xf] %v1092
        %1125 = vst [vmem:[%s188 + $0x18] sm:$0xf] %v1093
        %1126 = vst [vmem:[%s188 + $0x1c] sm:$0xf] %v1094
        %1127 = vst [vmem:[%s188 + $0x20] sm:$0xf] %v1095
        %1128 = vst [vmem:[%s188 + $0x24] sm:$0xf] %v1096
        %1129 = vst [vmem:[%s188 + $0x28] sm:$0xf] %v1097
        %1130 = vst [vmem:[%s188 + $0x2c] sm:$0xf] %v1098
        %1131 = vst [vmem:[%s188 + $0x30] sm:$0xf] %v1099
        %1132 = vst [vmem:[%s188 + $0x34] sm:$0xf] %v1100
        %1133 = vst [vmem:[%s188 + $0x38] sm:$0xf] %v1101
        %1134 = vst [vmem:[%s188 + $0x3c] sm:$0xf] %v1102
        %1135 = vst [vmem:[%s188 + $0x40] sm:$0xf] %v1103
        %1136 = vst [vmem:[%s188 + $0x44] sm:$0xf] %v1104
        %1137 = vst [vmem:[%s188 + $0x48] sm:$0xf] %v1105
        %1138 = vst [vmem:[%s188 + $0x4c] sm:$0xf] %v1106
        %1139 = vst [vmem:[%s188 + $0x50] sm:$0xf] %v1107
        %1140 = vst [vmem:[%s188 + $0x54] sm:$0xf] %v1108
        %1141 = vst [vmem:[%s188 + $0x58] sm:$0xf] %v1109
        %1142 = vst [vmem:[%s188 + $0x5c] sm:$0xf] %v1110
        %1143 = vst [vmem:[%s188 + $0x60] sm:$0xf] %v1111
        %1144 = vst [vmem:[%s188 + $0x64] sm:$0xf] %v1112
        %1145 = vst [vmem:[%s188 + $0x68] sm:$0xf] %v1113
        %1146 = vst [vmem:[%s188 + $0x6c] sm:$0xf] %v1114
        %1147 = vst [vmem:[%s188 + $0x70] sm:$0xf] %v1115
        %1148 = vst [vmem:[%s188 + $0x74] sm:$0xf] %v1116
        %1149 = vst [vmem:[%s188 + $0x78] sm:$0xf] %v1117
        %1150 = vst [vmem:[%s188 + $0x7c] sm:$0xf] %v1118
        %s1151 = sand.u32 %s109, 1
        %s1152 = scalar_lea.sflag [#allocation3], %s1151
        %s1153 = sand.u32 %s109, 1
        %s1154 = smul.addr %s1153, 128
        %s1155 = scalar_lea.vmem [#allocation2], %s1154
        // Predicated region
        $region33: #{tpu_custom_call.1} parent=31 // pred_check
          %p1156 = pneg %p119
        $region34: #{tpu_custom_call.1} parent=31 // pred_check_branch
          %1158 = sbr.rel (%p1156) target = $region36
        $region35: #{tpu_custom_call.1} parent=31 // pred_region
          %s1159 = smul.u32 32, %s22
          %1161 = vsyncadd %s1152, 0
          %s1162 = smul.addr %s21, 64
          %s1163 = sadd.s32 %s1159, %s1162
          %s1164 = smul.addr %s1163, 4
          %s1165 = scalar_lea.hbm %s3, %s1164
          %s1166 = sshll.u32 %s1155, 4
          %s1167 = int_to_ptr.vmem [resolvable:$true] %s1166
          %s1168 = sshll.u32 %s1165, 4
          %s1169 = int_to_ptr.hbm [resolvable:$true] %s1168
          %1174 = dma.vmem_to_hbm [thread:$0]  %s1167, 2048, %s1169, %s1152, 64, 64, 4
        $region36: #{tpu_custom_call.1} parent=31 // pred_fallthru
          _
      $region32: #{tpu_custom_call.1} parent=5 // pred_fallthru
        _
      %p1175 = scmp.le.s32.totalorder 2, %s12
      // Predicated region
      $region37: #{tpu_custom_call.1} parent=5 // pred_check
        %p1176 = pneg %p1175
      $region38: #{tpu_custom_call.1} parent=5 // pred_check_branch
        %1178 = sbr.rel (%p1176) target = $region40
      $region39: #{tpu_custom_call.1} parent=5 // pred_region
        %s1179 = ssub.s32 %s12, 2
        // Predicated region
        $region41: #{tpu_custom_call.1} parent=39 // pred_check
          %p1180 = pneg %p125
        $region42: #{tpu_custom_call.1} parent=39 // pred_check_branch
          %1182 = sbr.rel (%p1180) target = $region44
        $region43: #{tpu_custom_call.1} parent=39 // pred_region
          %s1183 = sand.u32 %s110, 1
          %s1184 = scalar_lea.sflag [#allocation3], %s1183
          %s1185 = sand.u32 %s110, 1
          %s1186 = smul.addr %s1185, 128
          %s1187 = scalar_lea.vmem [#allocation2], %s1186
          %1189 = dma.done %s1184, 2048
        $region44: #{tpu_custom_call.1} parent=39 // pred_fallthru
          _
      $region40: #{tpu_custom_call.1} parent=5 // pred_fallthru
        _
    $region6: #{tpu_custom_call.1} parent=1 // loop_footer
      %s16 = sadd.s32 1, %s12
    $region7: #{tpu_custom_call.1} parent=1 // loop_footer_branch
      %11 = sbr.rel target = $region3
    $region8: #{tpu_custom_call.1} parent=1 // loop_exit
      _
    %1190 = vsyncpa [#allocation3], 1
    %s1191 = scalar_lea.sflag [#allocation3], 1
    %1192 = vsyncpa %s1191, 1

</llo_original>
